<compile_context>
chip_gen: v6e
topology: v6e:2x2x1
jax: 0.10.0
libtpu: 0.0.40
codegen_flags: <defaults>
</compile_context>

<pallas_src>
import math

import jax
import jax.numpy as jnp
from jax.experimental import pallas as pl
from jax.experimental.pallas import tpu as pltpu


def _fused_linear_permute_flatten_kernel(x_ref, w_ref, b_ref, o_ref):
    """out[b, n*S + s] = sum_k x[b, s, k] * W[n, k] + bias[n].

    x_ref: (B, K*S) f32 VMEM block, k-major lanes: x_ref[b, k*S + s] = x[b,s,k].
    w_ref: (N*K,)   f32 SMEM scalars (flattened torch Linear weight, row-major).
    b_ref: (N,)     f32 SMEM scalars.
    o_ref: (B, N*S) f32 VMEM block == linear -> permute(0, 2, 1) -> flatten.
    """
    N = b_ref.shape[0]
    K = w_ref.shape[0] // N
    S = x_ref.shape[1] // K

    # K contiguous, unit-stride (B, S) lane-slice loads, reused across n.
    x_cols = [x_ref[:, k * S:(k + 1) * S] for k in range(K)]

    for n in range(N):                        # static unroll (N == 2)
        acc = x_cols[0] * w_ref[n * K + 0]    # VPU FMA, SMEM-scalar broadcast
        for k in range(1, K):                 # static unroll (K == 2)
            acc = acc + x_cols[k] * w_ref[n * K + k]
        # Direct slab store of output columns [n*S, (n+1)*S): no concat temp.
        o_ref[:, n * S:(n + 1) * S] = (acc + b_ref[n]).astype(o_ref.dtype)


@jax.jit
def model_forward(x1, weight, bias):
    """x1: (B, S, K); weight: (N, K) torch layout; bias: (N,) -> (B, N*S)."""
    B, S, K = x1.shape
    N = weight.shape[0]

    # Wrapper-side layout plumbing (48 bytes at this size): one contiguous 2-D
    # k-major slab so the kernel needs no strided / cross-lane access.
    x_km = jnp.transpose(x1, (0, 2, 1)).reshape(B, K * S)
    w_flat = weight.reshape(N * K)

    flops = 2 * B * S * N * K
    bytes_accessed = 4 * (B * S * K + N * K + N + B * N * S)

    out = pl.pallas_call(
        _fused_linear_permute_flatten_kernel,
        out_shape=jax.ShapeDtypeStruct((B, N * S), x1.dtype),
        in_specs=[
            pl.BlockSpec(memory_space=pltpu.MemorySpace.VMEM),   # x slab
            pl.BlockSpec(memory_space=pltpu.MemorySpace.SMEM),   # weight scalars
            pl.BlockSpec(memory_space=pltpu.MemorySpace.SMEM),   # bias scalars
        ],
        out_specs=pl.BlockSpec(memory_space=pltpu.MemorySpace.VMEM),
        cost_estimate=pl.CostEstimate(
            flops=flops, transcendentals=0, bytes_accessed=bytes_accessed),
    )(x_km, w_flat, bias)

    # TODO(synk): the original module next calls F.linear(v3, W) with W of
    # shape (2, 2) on a (B, 4)-feature tensor and then reads v4.size(2) on a
    # 2-D tensor; both are unconditionally invalid in PyTorch (the source sits
    # in a jit_fail corpus), so only the valid prefix up to v3 is reproduced.
    return out


if __name__ == "__main__":
    key = jax.random.PRNGKey(0)
    kx, kw, kb = jax.random.split(key, 3)

    B, S, D_in, D_out = 3, 2, 2, 2  # matches x1 = torch.randn(3, 2, 2), Linear(2, 2)

    x1 = jax.random.normal(kx, (B, S, D_in), dtype=jnp.float32)

    # Deterministic Linear(2, 2) init (PyTorch-style uniform bounds).
    bound = 1.0 / math.sqrt(D_in)
    weight = jax.random.uniform(kw, (D_out, D_in), jnp.float32, -bound, bound)
    bias = jax.random.uniform(kb, (D_out,), jnp.float32, -bound, bound)

    out = jax.block_until_ready(model_forward(x1, weight, bias))

    # Reference check against plain JAX for the implemented (valid) prefix.
    v1_ref = x1 @ weight.T + bias                                     # (B, S, N)
    v3_ref = jnp.transpose(v1_ref, (0, 2, 1)).reshape(B, D_out * S)   # (B, N*S)
    assert out.shape == (B, D_out * S)
    assert jnp.allclose(out, v3_ref, atol=1e-5), "mismatch vs JAX reference"

    print("KERNEL_OK")
</pallas_src>

<mosaic_0001>
module attributes {stable_mosaic.version = 11 : i64} {
  func.func @_fused_linear_permute_flatten_kernel(%arg0: memref<3x4xf32, #tpu.memory_space<vmem>>, %arg1: memref<4xf32, #tpu.memory_space<smem>>, %arg2: memref<2xf32, #tpu.memory_space<smem>>, %arg3: memref<3x4xf32, #tpu.memory_space<vmem>>) attributes {dimension_semantics = [], scalar_prefetch = 0 : i64, scratch_operands = 0 : i64, tpu.core_type = #tpu.core_type<tc>} {
    %c0 = arith.constant 0 : index
    %c0_0 = arith.constant 0 : index
    %0 = vector.load %arg0[%c0, %c0_0] : memref<3x4xf32, #tpu.memory_space<vmem>>, vector<3x2xf32>
    %c0_1 = arith.constant 0 : index
    %c2 = arith.constant 2 : index
    %1 = vector.load %arg0[%c0_1, %c2] : memref<3x4xf32, #tpu.memory_space<vmem>>, vector<3x2xf32>
    %c0_2 = arith.constant 0 : index
    %2 = memref.load %arg1[%c0_2] : memref<4xf32, #tpu.memory_space<smem>>
    %3 = vector.broadcast %2 : f32 to vector<3x2xf32>
    %4 = arith.mulf %0, %3 : vector<3x2xf32>
    %c1 = arith.constant 1 : index
    %5 = memref.load %arg1[%c1] : memref<4xf32, #tpu.memory_space<smem>>
    %6 = vector.broadcast %5 : f32 to vector<3x2xf32>
    %7 = arith.mulf %1, %6 : vector<3x2xf32>
    %8 = arith.addf %4, %7 : vector<3x2xf32>
    %c0_3 = arith.constant 0 : index
    %9 = memref.load %arg2[%c0_3] : memref<2xf32, #tpu.memory_space<smem>>
    %10 = vector.broadcast %9 : f32 to vector<3x2xf32>
    %11 = arith.addf %8, %10 : vector<3x2xf32>
    %c0_4 = arith.constant 0 : index
    %c0_5 = arith.constant 0 : index
    %12 = vector.load %arg3[%c0_4, %c0_5] : memref<3x4xf32, #tpu.memory_space<vmem>>, vector<3x2xf32>
    tpu.vector_store %arg3[%c0_4, %c0_5], %11 {strides = array<i32>} : memref<3x4xf32, #tpu.memory_space<vmem>>, vector<3x2xf32>,
    %c2_6 = arith.constant 2 : index
    %13 = memref.load %arg1[%c2_6] : memref<4xf32, #tpu.memory_space<smem>>
    %14 = vector.broadcast %13 : f32 to vector<3x2xf32>
    %15 = arith.mulf %0, %14 : vector<3x2xf32>
    %c3 = arith.constant 3 : index
    %16 = memref.load %arg1[%c3] : memref<4xf32, #tpu.memory_space<smem>>
    %17 = vector.broadcast %16 : f32 to vector<3x2xf32>
    %18 = arith.mulf %1, %17 : vector<3x2xf32>
    %19 = arith.addf %15, %18 : vector<3x2xf32>
    %c1_7 = arith.constant 1 : index
    %20 = memref.load %arg2[%c1_7] : memref<2xf32, #tpu.memory_space<smem>>
    %21 = vector.broadcast %20 : f32 to vector<3x2xf32>
    %22 = arith.addf %19, %21 : vector<3x2xf32>
    %c0_8 = arith.constant 0 : index
    %c2_9 = arith.constant 2 : index
    %23 = vector.load %arg3[%c0_8, %c2_9] : memref<3x4xf32, #tpu.memory_space<vmem>>, vector<3x2xf32>
    tpu.vector_store %arg3[%c0_8, %c2_9], %22 {strides = array<i32>} : memref<3x4xf32, #tpu.memory_space<vmem>>, vector<3x2xf32>,
    return
  }
}

</mosaic_0001>

<llo_original>
// kernel: model_forward.1
$region0: #{model_forward.1}
  #allocation0 [shape = 'u32[]', space=smem, size = 0x4, offset = 0x4, fixed_abs, tag = 'smem constant byte address 0x4 - core index']
  #allocation1 [shape = 'u32[144,128]{1,0:T(1,128)}', space=vmem, size = 0x12000, scoped, tag = 'internal scratch']
  %s0 = inlined_call_operand.vmem [shape: f32[3,4], index: 0, kind: input, shape index: {}]
  %s1 = inlined_call_operand.vmem [shape: f32[4], index: 1, kind: input, shape index: {}]
  %s2 = inlined_call_operand.vmem [shape: f32[2], index: 2, kind: input, shape index: {}]
  %s3 = inlined_call_operand.hbm [shape: f32[3,4], index: 3, kind: output, shape index: {}]
  %s4 = sld [smem:[#allocation0]]
  $region30: #{model_forward.1} parent=0
    _
  %s6 = ssub.s32 1, %s4
  %s7 = scalar_select 0, %s6, %s4
  $region1: #{model_forward.1} parent=0
    #allocation2 [shape = 'u8[512]{0}', space=smem, size = 0x200, scoped, tag = 'input window, operand 1, single buffered']
    #allocation3 [shape = 's32[1]{0}', space=sflag, size = 0x4, scoped, tag = 'scoped memory for model_forward.1']
    #allocation4 [shape = 's32[1]{0}', space=sflag, size = 0x4, scoped, tag = 'scoped memory for model_forward.1']
    #allocation5 [shape = 'u8[512]{0}', space=smem, size = 0x200, scoped, tag = 'input window, operand 2, single buffered']
    #allocation6 [shape = 's32[1]{0}', space=sflag, size = 0x4, scoped, tag = 'scoped memory for model_forward.1']
    #allocation7 [shape = 'u8[2048]{0}', space=vmem, size = 0x800, scoped, tag = 'output window, operand 0, single buffered']
    %8 = vsyncpa [#allocation4], 0
    %9 = vsyncpa [#allocation6], 0
    %10 = vsyncpa [#allocation3], 0
    // Predicated region
    $region2: #{model_forward.1} parent=1 // pred_check
      _
    $region3: #{model_forward.1} parent=1 // pred_check_branch
      %12 = sbr.rel (0) target = $region5
    $region4: #{model_forward.1} parent=1 // pred_region
      _
    $region5: #{model_forward.1} parent=1 // pred_fallthru
      _
    // Predicated region
    $region6: #{model_forward.1} parent=1 // pred_check
      _
    $region7: #{model_forward.1} parent=1 // pred_check_branch
      %14 = sbr.rel (0) target = $region9
    $region8: #{model_forward.1} parent=1 // pred_region
      %s16 = ssub.s32 16, 16
      %17 = vsyncadd [#allocation4], %s16
      %s19 = sshll.u32 %s1, 4
      %s20 = int_to_ptr.vmem [resolvable:$true] %s19
      %22 = dma.vmem_to_smem %s20, 16, [#allocation2], [#allocation4]
    $region9: #{model_forward.1} parent=1 // pred_fallthru
      _
    // Predicated region
    $region10: #{model_forward.1} parent=1 // pred_check
      _
    $region11: #{model_forward.1} parent=1 // pred_check_branch
      %24 = sbr.rel (0) target = $region13
    $region12: #{model_forward.1} parent=1 // pred_region
      %s26 = ssub.s32 16, 16
      %27 = vsyncadd [#allocation6], %s26
      %s29 = sshll.u32 %s2, 4
      %s30 = int_to_ptr.vmem [resolvable:$true] %s29
      %32 = dma.vmem_to_smem %s30, 16, [#allocation5], [#allocation6]
    $region13: #{model_forward.1} parent=1 // pred_fallthru
      _
    // Predicated region
    $region14: #{model_forward.1} parent=1 // pred_check
      _
    $region15: #{model_forward.1} parent=1 // pred_check_branch
      %34 = sbr.rel (0) target = $region17
    $region16: #{model_forward.1} parent=1 // pred_region
      %35 = dma.done [#allocation4], 16
    $region17: #{model_forward.1} parent=1 // pred_fallthru
      _
    // Predicated region
    $region18: #{model_forward.1} parent=1 // pred_check
      _
    $region19: #{model_forward.1} parent=1 // pred_check_branch
      %37 = sbr.rel (0) target = $region21
    $region20: #{model_forward.1} parent=1 // pred_region
      %38 = dma.done [#allocation6], 16
    $region21: #{model_forward.1} parent=1 // pred_fallthru
      _
    %39 = sfence
    %v40 = vld [vmem:[%s0] sm:$0x7]
    %s41 = sld [smem:[#allocation2]]
    %v42 = vstv %s41
    %v43 = vmul.f32 %v40, %v42
    %s44 = sld [smem:[#allocation2 + $0x1]]
    %v45 = vstv %s44
    %v46 = vmul.f32 %v40, %v45
    %48 = vrot.lane.b32.xlu0 %v46, 126
    %v49 = vpop.permute.xlu0 %48
    %v51 = vadd.f32 %v43, %v49
    %s52 = sld [smem:[#allocation5]]
    %v53 = vstv %s52
    %v54 = vadd.f32 %v51, %v53
    %vm55 = vcmask 10240
    %56 = vst.msk [vmem:[#allocation7] sm:$0x7] %vm55, %v54
    %s57 = sld [smem:[#allocation2 + $0x2]]
    %v58 = vstv %s57
    %v59 = vmul.f32 %v40, %v58
    %s60 = sld [smem:[#allocation2 + $0x3]]
    %v61 = vstv %s60
    %v62 = vmul.f32 %v40, %v61
    %64 = vrot.lane.b32.xlu0 %v62, 126
    %v65 = vpop.permute.xlu0 %64
    %v67 = vadd.f32 %v59, %v65
    %s68 = sld [smem:[#allocation5 + $0x1]]
    %v69 = vstv %s68
    %v70 = vadd.f32 %v67, %v69
    %72 = vrot.lane.b32.xlu0 %v70, 2
    %v73 = vpop.permute.xlu0 %72
    %vm75 = vcmask 26640
    %76 = vst.msk [vmem:[#allocation7] sm:$0x7] %vm75, %v73
    // Predicated region
    $region22: #{model_forward.1} parent=1 // pred_check
      _
    $region23: #{model_forward.1} parent=1 // pred_check_branch
      %78 = sbr.rel (0) target = $region25
    $region24: #{model_forward.1} parent=1 // pred_region
      %s80 = ssub.s32 64, 64
      %81 = vsyncadd [#allocation3], %s80
      %s83 = sshll.u32 [#allocation7], 4
      %s84 = int_to_ptr.vmem [resolvable:$true] %s83
      %86 = dma.vmem_to_hbm [thread:$0]  %s84, 64, %s3, [#allocation3]
    $region25: #{model_forward.1} parent=1 // pred_fallthru
      _
    // Predicated region
    $region26: #{model_forward.1} parent=1 // pred_check
      _
    $region27: #{model_forward.1} parent=1 // pred_check_branch
      %88 = sbr.rel (0) target = $region29
    $region28: #{model_forward.1} parent=1 // pred_region
      %89 = dma.done [#allocation3], 64
    $region29: #{model_forward.1} parent=1 // pred_fallthru
      _
    %90 = vsyncpa [#allocation3], 1
    %91 = vsyncpa [#allocation4], 1
    %92 = vsyncpa [#allocation6], 1

</llo_original>
